<compile_context>
chip_gen: v7x
topology: tpu7x:2x2x1
jax: 0.10.0
libtpu: 0.0.40
codegen_flags: <defaults>
</compile_context>

<pallas_src>
import functools

import jax
import jax.numpy as jnp
from jax.experimental import pallas as pl
from jax.experimental.pallas import tpu as pltpu

BINS = 10
EDGES = [float(i) / BINS for i in range(BINS + 1)]
EDGES[-1] += 1e-6
LANES = 128
SUBLANES = 8


def ghmc_kernel(x_ref, t_ref, m_ref, acc_ref, *, rows_total, tr, spc, need_mask):
    """acc_ref: (1, 2*BINS, 8, 128) VMEM accumulator (output, resident across step axis).

    acc[0, i]        accumulates the cumulative count  sum(g < EDGES[i+1])
    acc[0, BINS+i]   accumulates the cumulative bce sum sum(bce where g < EDGES[i+1])
    """
    c = pl.program_id(0)   # megacore split ("parallel")
    j = pl.program_id(1)   # row-tile step  ("arbitrary")

    @pl.when(j == 0)
    def _init():
        acc_ref[...] = jnp.zeros_like(acc_ref)

    x = x_ref[...].astype(jnp.float32)
    t = t_ref[...].astype(jnp.float32)
    m = m_ref[...]

    s = jax.nn.sigmoid(x)
    g = jnp.abs(s - t)
    valid = m > 0
    if need_mask:
        # Last tile(s) over-run the array: mask garbage rows by global row index.
        row0 = (c * spc + j) * tr
        rid = jax.lax.broadcasted_iota(jnp.int32, (tr, LANES), 0) + row0
        valid = jnp.logical_and(valid, rid < rows_total)

    # Invalid / out-of-range elements get an out-of-range sentinel so they land in
    # no bin (EDGES[-1] = 1 + 1e-6 < 2.0) — bit-exact equivalent of "& valid".
    gv = jnp.where(valid, g, 2.0)

    # BCE-with-logits, reusing the sigmoid:  log(1+exp(-|x|)) == -log(max(s, 1-s)).
    # Garbage x in over-run rows may make bce NaN/Inf; it is only ever combined via
    # selects gated by `gv < edge` (False there), so it never contaminates the sums.
    bce = jnp.maximum(x, 0.0) - x * t - jnp.log(jnp.maximum(s, 1.0 - s))

    # (tr,128) -> (tr/8, 8, 128) is layout-preserving; axis-0 sums are pure VALU vreg adds.
    gv3 = gv.reshape(tr // SUBLANES, SUBLANES, LANES)
    bce3 = bce.reshape(tr // SUBLANES, SUBLANES, LANES)

    for i in range(BINS):
        lt = gv3 < EDGES[i + 1]                                   # cumulative indicator
        acc_ref[0, i] = acc_ref[0, i] + jnp.sum(
            lt.astype(jnp.float32), axis=0)
        acc_ref[0, BINS + i] = acc_ref[0, BINS + i] + jnp.sum(
            jnp.where(lt, bce3, 0.0), axis=0)


def _round_up(a, b):
    return ((a + b - 1) // b) * b


def ghmc_loss_pallas(x, t, m, *, tile_rows=1024):
    """GHMC classification loss; x / t / m are [batch_num, class_num] arrays."""
    n_elem = x.size
    xf = jnp.ravel(x)
    tf = jnp.ravel(t)      # dtype passed through; cast to f32 inside the kernel
    mf = jnp.ravel(m)

    # Pad only to an (8*128)-element boundary (mask pads with 0 => ignored by the
    # sentinel).  No copy at all when the input is already 1024-element aligned.
    padded = _round_up(n_elem, SUBLANES * LANES)
    pad = padded - n_elem
    if pad:
        xf = jnp.pad(xf, (0, pad))
        tf = jnp.pad(tf, (0, pad))
        mf = jnp.pad(mf, (0, pad))

    rows = padded // LANES                    # multiple of 8, >= 8
    x2 = xf.reshape(rows, LANES)
    t2 = tf.reshape(rows, LANES)
    m2 = mf.reshape(rows, LANES)

    tr = min(tile_rows, rows)
    tr = max(SUBLANES, (tr // SUBLANES) * SUBLANES)   # sublane-aligned tile height
    nb = (rows + tr - 1) // tr                        # number of real row tiles
    nsplit = 2 if nb >= 2 else 1                      # v7x megacore split; harmless on 1 TC
    spc = (nb + nsplit - 1) // nsplit                 # steps per core
    need_mask = (nsplit * spc * tr) > rows            # any over-run to mask in-kernel?

    def in_map(c, j):
        # Clamp redundant trailing iterations to the last real tile; their rows are
        # >= rows_total so the in-kernel mask zeroes their contribution.
        return (jnp.minimum(c * spc + j, nb - 1), 0)

    kernel = functools.partial(ghmc_kernel, rows_total=rows, tr=tr, spc=spc,
                               need_mask=need_mask)

    acc = pl.pallas_call(
        kernel,
        out_shape=jax.ShapeDtypeStruct((nsplit, 2 * BINS, SUBLANES, LANES), jnp.float32),
        grid=(nsplit, spc),
        in_specs=[
            pl.BlockSpec((tr, LANES), in_map),
            pl.BlockSpec((tr, LANES), in_map),
            pl.BlockSpec((tr, LANES), in_map),
        ],
        out_specs=pl.BlockSpec((1, 2 * BINS, SUBLANES, LANES),
                               lambda c, j: (c, 0, 0, 0)),
        compiler_params=pltpu.CompilerParams(
            dimension_semantics=("parallel", "arbitrary"),
            vmem_limit_bytes=32 * 1024 * 1024,
        ),
    )(x2, t2, m2)

    # Tiny scalar epilogue in plain JAX: fold per-core / per-slot partials, take the
    # per-bin differences of the cumulative sums, and form the loss.
    sums = jnp.sum(acc, axis=(0, 2, 3))       # (2*BINS,) cumulative counts / bce sums
    cum_cnt = sums[:BINS]
    cum_bs = sums[BINS:]
    zero = jnp.zeros((1,), jnp.float32)
    cnt = cum_cnt - jnp.concatenate([zero, cum_cnt[:-1]])
    bs = cum_bs - jnp.concatenate([zero, cum_bs[:-1]])
    has = cnt > 0.0
    total = jnp.sum(jnp.where(has, bs / jnp.maximum(cnt, 1.0), 0.0))
    n = jnp.sum(has.astype(jnp.float32))
    return total / jnp.maximum(n, 1.0)


def ghmc_loss_ref(x, t, m):
    """Pure-JAX reference mirroring the PyTorch module (momentum == 0)."""
    x = x.astype(jnp.float32)
    t = t.astype(jnp.float32)
    valid = m > 0
    tot = jnp.maximum(jnp.sum(valid.astype(jnp.float32)), 1.0)
    g = jnp.abs(jax.nn.sigmoid(x) - t)
    weights = jnp.zeros_like(x)
    n = jnp.float32(0.0)
    for i in range(BINS):
        inds = (g >= EDGES[i]) & (g < EDGES[i + 1]) & valid
        num = jnp.sum(inds.astype(jnp.float32))
        has = num > 0.0
        w_i = jnp.where(has, tot / jnp.maximum(num, 1.0), 0.0)
        weights = weights + inds.astype(jnp.float32) * w_i
        n = n + jnp.where(has, 1.0, 0.0)
    weights = weights / jnp.maximum(n, 1.0)
    bce = jnp.maximum(x, 0.0) - x * t + jnp.log1p(jnp.exp(-jnp.abs(x)))
    return jnp.sum(weights * bce) / tot


if __name__ == "__main__":
    B, C = 8, 32  # [batch_num, class_num]
    key = jax.random.PRNGKey(0)
    k1, k2, k3 = jax.random.split(key, 3)
    x = jax.random.normal(k1, (B, C), dtype=jnp.float32) * 2.0        # logits
    t = jax.random.bernoulli(k2, 0.5, (B, C)).astype(jnp.float32)     # binary targets
    m = jax.random.bernoulli(k3, 0.8, (B, C)).astype(jnp.float32)     # valid mask

    loss = jax.block_until_ready(ghmc_loss_pallas(x, t, m))
    ref = jax.block_until_ready(ghmc_loss_ref(x, t, m))

    assert jnp.isfinite(loss), "non-finite loss"
    assert jnp.allclose(loss, ref, rtol=1e-5, atol=1e-5), (loss, ref)
    print("KERNEL_OK")
</pallas_src>

<mosaic_0001>
module attributes {stable_mosaic.version = 11 : i64} {
  func.func @ghmc_kernel(%arg0: i32, %arg1: i32, %arg2: memref<8x128xf32, #tpu.memory_space<vmem>>, %arg3: memref<8x128xf32, #tpu.memory_space<vmem>>, %arg4: memref<8x128xf32, #tpu.memory_space<vmem>>, %arg5: memref<1x20x8x128xf32, #tpu.memory_space<vmem>>) attributes {dimension_semantics = [#tpu.dimension_semantics<parallel>, #tpu.dimension_semantics<arbitrary>], iteration_bounds = array<i64: 1, 1>, scalar_prefetch = 0 : i64, scratch_operands = 0 : i64, tpu.core_type = #tpu.core_type<tc>, window_params = [{transform_indices = @transform_0, window_bounds = array<i64: 8, 128>}, {transform_indices = @transform_1, window_bounds = array<i64: 8, 128>}, {transform_indices = @transform_2, window_bounds = array<i64: 8, 128>}, {transform_indices = @transform_3, window_bounds = array<i64: 1, 20, 8, 128>}]} {
    %c0_i32 = arith.constant 0 : i32
    %0 = arith.cmpi eq, %arg1, %c0_i32 : i32
    %1 = arith.extui %0 : i1 to i32
    %c0_i32_0 = arith.constant 0 : i32
    %2 = arith.cmpi ne, %1, %c0_i32_0 : i32
    scf.if %2 {
      %cst_191 = arith.constant 0.000000e+00 : f32
      %228 = vector.broadcast %cst_191 : f32 to vector<1x20x8x128xf32>
      %c0_192 = arith.constant 0 : index
      %c0_193 = arith.constant 0 : index
      %c0_194 = arith.constant 0 : index
      %c0_195 = arith.constant 0 : index
      %229 = vector.load %arg5[%c0_192, %c0_193, %c0_194, %c0_195] : memref<1x20x8x128xf32, #tpu.memory_space<vmem>>, vector<1x20x8x128xf32>
      tpu.vector_store %arg5[%c0_192, %c0_193, %c0_194, %c0_195], %228 {strides = array<i32>} : memref<1x20x8x128xf32, #tpu.memory_space<vmem>>, vector<1x20x8x128xf32>,
    } else {
    }
    %c0 = arith.constant 0 : index
    %c0_1 = arith.constant 0 : index
    %3 = vector.load %arg2[%c0, %c0_1] : memref<8x128xf32, #tpu.memory_space<vmem>>, vector<8x128xf32>
    %c0_2 = arith.constant 0 : index
    %c0_3 = arith.constant 0 : index
    %4 = vector.load %arg3[%c0_2, %c0_3] : memref<8x128xf32, #tpu.memory_space<vmem>>, vector<8x128xf32>
    %c0_4 = arith.constant 0 : index
    %c0_5 = arith.constant 0 : index
    %5 = vector.load %arg4[%c0_4, %c0_5] : memref<8x128xf32, #tpu.memory_space<vmem>>, vector<8x128xf32>
    %6 = arith.negf %3 : vector<8x128xf32>
    %7 = math.exp %6 : vector<8x128xf32>
    %cst = arith.constant 1.000000e+00 : f32
    %8 = vector.broadcast %cst : f32 to vector<8x128xf32>
    %9 = arith.addf %8, %7 : vector<8x128xf32>
    %10 = arith.divf %8, %9 : vector<8x128xf32>
    %11 = arith.subf %10, %4 : vector<8x128xf32>
    %12 = math.absf %11 : vector<8x128xf32>
    %cst_6 = arith.constant 0.000000e+00 : f32
    %13 = vector.broadcast %cst_6 : f32 to vector<8x128xf32>
    %14 = arith.cmpf ogt, %5, %13 : vector<8x128xf32>
    %cst_7 = arith.constant 2.000000e+00 : f32
    %15 = vector.broadcast %cst_7 : f32 to vector<8x128xf32>
    %16 = arith.select %14, %12, %15 : vector<8x128xi1>, vector<8x128xf32>
    %cst_8 = arith.constant 0.000000e+00 : f32
    %17 = vector.broadcast %cst_8 : f32 to vector<8x128xf32>
    %18 = arith.maximumf %3, %17 : vector<8x128xf32>
    %19 = arith.mulf %3, %4 : vector<8x128xf32>
    %20 = arith.subf %18, %19 : vector<8x128xf32>
    %cst_9 = arith.constant 1.000000e+00 : f32
    %21 = vector.broadcast %cst_9 : f32 to vector<8x128xf32>
    %22 = arith.subf %21, %10 : vector<8x128xf32>
    %23 = arith.maximumf %10, %22 : vector<8x128xf32>
    %24 = math.log %23 : vector<8x128xf32>
    %25 = arith.subf %20, %24 : vector<8x128xf32>
    %26 = vector.shape_cast %16 : vector<8x128xf32> to vector<1x8x128xf32>
    %27 = vector.shape_cast %25 : vector<8x128xf32> to vector<1x8x128xf32>
    %cst_10 = arith.constant 1.000000e-01 : f32
    %28 = vector.broadcast %cst_10 : f32 to vector<1x8x128xf32>
    %29 = arith.cmpf olt, %26, %28 : vector<1x8x128xf32>
    %c0_11 = arith.constant 0 : index
    %c0_12 = arith.constant 0 : index
    %c0_13 = arith.constant 0 : index
    %c0_14 = arith.constant 0 : index
    %30 = vector.load %arg5[%c0_11, %c0_12, %c0_13, %c0_14] : memref<1x20x8x128xf32, #tpu.memory_space<vmem>>, vector<1x1x8x128xf32>
    %31 = vector.shape_cast %30 : vector<1x1x8x128xf32> to vector<8x128xf32>
    %32 = arith.extui %29 : vector<1x8x128xi1> to vector<1x8x128xi32>
    %33 = arith.sitofp %32 : vector<1x8x128xi32> to vector<1x8x128xf32>
    %cst_15 = arith.constant dense<0.000000e+00> : vector<8x128xf32>
    %34 = vector.multi_reduction <add>, %33, %cst_15 [0] : vector<1x8x128xf32> to vector<8x128xf32>
    %35 = arith.addf %31, %34 : vector<8x128xf32>
    %c0_16 = arith.constant 0 : index
    %c0_17 = arith.constant 0 : index
    %c0_18 = arith.constant 0 : index
    %c0_19 = arith.constant 0 : index
    %36 = vector.load %arg5[%c0_16, %c0_17, %c0_18, %c0_19] : memref<1x20x8x128xf32, #tpu.memory_space<vmem>>, vector<1x1x8x128xf32>
    %37 = vector.shape_cast %36 : vector<1x1x8x128xf32> to vector<8x128xf32>
    %38 = vector.shape_cast %35 : vector<8x128xf32> to vector<1x1x8x128xf32>
    tpu.vector_store %arg5[%c0_16, %c0_17, %c0_18, %c0_19], %38 {strides = array<i32>} : memref<1x20x8x128xf32, #tpu.memory_space<vmem>>, vector<1x1x8x128xf32>,
    %c0_20 = arith.constant 0 : index
    %c10 = arith.constant 10 : index
    %c0_21 = arith.constant 0 : index
    %c0_22 = arith.constant 0 : index
    %39 = vector.load %arg5[%c0_20, %c10, %c0_21, %c0_22] : memref<1x20x8x128xf32, #tpu.memory_space<vmem>>, vector<1x1x8x128xf32>
    %40 = vector.shape_cast %39 : vector<1x1x8x128xf32> to vector<8x128xf32>
    %cst_23 = arith.constant 0.000000e+00 : f32
    %41 = vector.broadcast %cst_23 : f32 to vector<1x8x128xf32>
    %42 = arith.select %29, %27, %41 : vector<1x8x128xi1>, vector<1x8x128xf32>
    %cst_24 = arith.constant dense<0.000000e+00> : vector<8x128xf32>
    %43 = vector.multi_reduction <add>, %42, %cst_24 [0] : vector<1x8x128xf32> to vector<8x128xf32>
    %44 = arith.addf %40, %43 : vector<8x128xf32>
    %c0_25 = arith.constant 0 : index
    %c10_26 = arith.constant 10 : index
    %c0_27 = arith.constant 0 : index
    %c0_28 = arith.constant 0 : index
    %45 = vector.load %arg5[%c0_25, %c10_26, %c0_27, %c0_28] : memref<1x20x8x128xf32, #tpu.memory_space<vmem>>, vector<1x1x8x128xf32>
    %46 = vector.shape_cast %45 : vector<1x1x8x128xf32> to vector<8x128xf32>
    %47 = vector.shape_cast %44 : vector<8x128xf32> to vector<1x1x8x128xf32>
    tpu.vector_store %arg5[%c0_25, %c10_26, %c0_27, %c0_28], %47 {strides = array<i32>} : memref<1x20x8x128xf32, #tpu.memory_space<vmem>>, vector<1x1x8x128xf32>,
    %cst_29 = arith.constant 2.000000e-01 : f32
    %48 = vector.broadcast %cst_29 : f32 to vector<1x8x128xf32>
    %49 = arith.cmpf olt, %26, %48 : vector<1x8x128xf32>
    %c0_30 = arith.constant 0 : index
    %c1 = arith.constant 1 : index
    %c0_31 = arith.constant 0 : index
    %c0_32 = arith.constant 0 : index
    %50 = vector.load %arg5[%c0_30, %c1, %c0_31, %c0_32] : memref<1x20x8x128xf32, #tpu.memory_space<vmem>>, vector<1x1x8x128xf32>
    %51 = vector.shape_cast %50 : vector<1x1x8x128xf32> to vector<8x128xf32>
    %52 = arith.extui %49 : vector<1x8x128xi1> to vector<1x8x128xi32>
    %53 = arith.sitofp %52 : vector<1x8x128xi32> to vector<1x8x128xf32>
    %cst_33 = arith.constant dense<0.000000e+00> : vector<8x128xf32>
    %54 = vector.multi_reduction <add>, %53, %cst_33 [0] : vector<1x8x128xf32> to vector<8x128xf32>
    %55 = arith.addf %51, %54 : vector<8x128xf32>
    %c0_34 = arith.constant 0 : index
    %c1_35 = arith.constant 1 : index
    %c0_36 = arith.constant 0 : index
    %c0_37 = arith.constant 0 : index
    %56 = vector.load %arg5[%c0_34, %c1_35, %c0_36, %c0_37] : memref<1x20x8x128xf32, #tpu.memory_space<vmem>>, vector<1x1x8x128xf32>
    %57 = vector.shape_cast %56 : vector<1x1x8x128xf32> to vector<8x128xf32>
    %58 = vector.shape_cast %55 : vector<8x128xf32> to vector<1x1x8x128xf32>
    tpu.vector_store %arg5[%c0_34, %c1_35, %c0_36, %c0_37], %58 {strides = array<i32>} : memref<1x20x8x128xf32, #tpu.memory_space<vmem>>, vector<1x1x8x128xf32>,
    %c0_38 = arith.constant 0 : index
    %c11 = arith.constant 11 : index
    %c0_39 = arith.constant 0 : index
    %c0_40 = arith.constant 0 : index
    %59 = vector.load %arg5[%c0_38, %c11, %c0_39, %c0_40] : memref<1x20x8x128xf32, #tpu.memory_space<vmem>>, vector<1x1x8x128xf32>
    %60 = vector.shape_cast %59 : vector<1x1x8x128xf32> to vector<8x128xf32>
    %cst_41 = arith.constant 0.000000e+00 : f32
    %61 = vector.broadcast %cst_41 : f32 to vector<1x8x128xf32>
    %62 = arith.select %49, %27, %61 : vector<1x8x128xi1>, vector<1x8x128xf32>
    %cst_42 = arith.constant dense<0.000000e+00> : vector<8x128xf32>
    %63 = vector.multi_reduction <add>, %62, %cst_42 [0] : vector<1x8x128xf32> to vector<8x128xf32>
    %64 = arith.addf %60, %63 : vector<8x128xf32>
    %c0_43 = arith.constant 0 : index
    %c11_44 = arith.constant 11 : index
    %c0_45 = arith.constant 0 : index
    %c0_46 = arith.constant 0 : index
    %65 = vector.load %arg5[%c0_43, %c11_44, %c0_45, %c0_46] : memref<1x20x8x128xf32, #tpu.memory_space<vmem>>, vector<1x1x8x128xf32>
    %66 = vector.shape_cast %65 : vector<1x1x8x128xf32> to vector<8x128xf32>
    %67 = vector.shape_cast %64 : vector<8x128xf32> to vector<1x1x8x128xf32>
    tpu.vector_store %arg5[%c0_43, %c11_44, %c0_45, %c0_46], %67 {strides = array<i32>} : memref<1x20x8x128xf32, #tpu.memory_space<vmem>>, vector<1x1x8x128xf32>,
    %cst_47 = arith.constant 3.000000e-01 : f32
    %68 = vector.broadcast %cst_47 : f32 to vector<1x8x128xf32>
    %69 = arith.cmpf olt, %26, %68 : vector<1x8x128xf32>
    %c0_48 = arith.constant 0 : index
    %c2 = arith.constant 2 : index
    %c0_49 = arith.constant 0 : index
    %c0_50 = arith.constant 0 : index
    %70 = vector.load %arg5[%c0_48, %c2, %c0_49, %c0_50] : memref<1x20x8x128xf32, #tpu.memory_space<vmem>>, vector<1x1x8x128xf32>
    %71 = vector.shape_cast %70 : vector<1x1x8x128xf32> to vector<8x128xf32>
    %72 = arith.extui %69 : vector<1x8x128xi1> to vector<1x8x128xi32>
    %73 = arith.sitofp %72 : vector<1x8x128xi32> to vector<1x8x128xf32>
    %cst_51 = arith.constant dense<0.000000e+00> : vector<8x128xf32>
    %74 = vector.multi_reduction <add>, %73, %cst_51 [0] : vector<1x8x128xf32> to vector<8x128xf32>
    %75 = arith.addf %71, %74 : vector<8x128xf32>
    %c0_52 = arith.constant 0 : index
    %c2_53 = arith.constant 2 : index
    %c0_54 = arith.constant 0 : index
    %c0_55 = arith.constant 0 : index
    %76 = vector.load %arg5[%c0_52, %c2_53, %c0_54, %c0_55] : memref<1x20x8x128xf32, #tpu.memory_space<vmem>>, vector<1x1x8x128xf32>
    %77 = vector.shape_cast %76 : vector<1x1x8x128xf32> to vector<8x128xf32>
    %78 = vector.shape_cast %75 : vector<8x128xf32> to vector<1x1x8x128xf32>
    tpu.vector_store %arg5[%c0_52, %c2_53, %c0_54, %c0_55], %78 {strides = array<i32>} : memref<1x20x8x128xf32, #tpu.memory_space<vmem>>, vector<1x1x8x128xf32>,
    %c0_56 = arith.constant 0 : index
    %c12 = arith.constant 12 : index
    %c0_57 = arith.constant 0 : index
    %c0_58 = arith.constant 0 : index
    %79 = vector.load %arg5[%c0_56, %c12, %c0_57, %c0_58] : memref<1x20x8x128xf32, #tpu.memory_space<vmem>>, vector<1x1x8x128xf32>
    %80 = vector.shape_cast %79 : vector<1x1x8x128xf32> to vector<8x128xf32>
    %cst_59 = arith.constant 0.000000e+00 : f32
    %81 = vector.broadcast %cst_59 : f32 to vector<1x8x128xf32>
    %82 = arith.select %69, %27, %81 : vector<1x8x128xi1>, vector<1x8x128xf32>
    %cst_60 = arith.constant dense<0.000000e+00> : vector<8x128xf32>
    %83 = vector.multi_reduction <add>, %82, %cst_60 [0] : vector<1x8x128xf32> to vector<8x128xf32>
    %84 = arith.addf %80, %83 : vector<8x128xf32>
    %c0_61 = arith.constant 0 : index
    %c12_62 = arith.constant 12 : index
    %c0_63 = arith.constant 0 : index
    %c0_64 = arith.constant 0 : index
    %85 = vector.load %arg5[%c0_61, %c12_62, %c0_63, %c0_64] : memref<1x20x8x128xf32, #tpu.memory_space<vmem>>, vector<1x1x8x128xf32>
    %86 = vector.shape_cast %85 : vector<1x1x8x128xf32> to vector<8x128xf32>
    %87 = vector.shape_cast %84 : vector<8x128xf32> to vector<1x1x8x128xf32>
    tpu.vector_store %arg5[%c0_61, %c12_62, %c0_63, %c0_64], %87 {strides = array<i32>} : memref<1x20x8x128xf32, #tpu.memory_space<vmem>>, vector<1x1x8x128xf32>,
    %cst_65 = arith.constant 4.000000e-01 : f32
    %88 = vector.broadcast %cst_65 : f32 to vector<1x8x128xf32>
    %89 = arith.cmpf olt, %26, %88 : vector<1x8x128xf32>
    %c0_66 = arith.constant 0 : index
    %c3 = arith.constant 3 : index
    %c0_67 = arith.constant 0 : index
    %c0_68 = arith.constant 0 : index
    %90 = vector.load %arg5[%c0_66, %c3, %c0_67, %c0_68] : memref<1x20x8x128xf32, #tpu.memory_space<vmem>>, vector<1x1x8x128xf32>
    %91 = vector.shape_cast %90 : vector<1x1x8x128xf32> to vector<8x128xf32>
    %92 = arith.extui %89 : vector<1x8x128xi1> to vector<1x8x128xi32>
    %93 = arith.sitofp %92 : vector<1x8x128xi32> to vector<1x8x128xf32>
    %cst_69 = arith.constant dense<0.000000e+00> : vector<8x128xf32>
    %94 = vector.multi_reduction <add>, %93, %cst_69 [0] : vector<1x8x128xf32> to vector<8x128xf32>
    %95 = arith.addf %91, %94 : vector<8x128xf32>
    %c0_70 = arith.constant 0 : index
    %c3_71 = arith.constant 3 : index
    %c0_72 = arith.constant 0 : index
    %c0_73 = arith.constant 0 : index
    %96 = vector.load %arg5[%c0_70, %c3_71, %c0_72, %c0_73] : memref<1x20x8x128xf32, #tpu.memory_space<vmem>>, vector<1x1x8x128xf32>
    %97 = vector.shape_cast %96 : vector<1x1x8x128xf32> to vector<8x128xf32>
    %98 = vector.shape_cast %95 : vector<8x128xf32> to vector<1x1x8x128xf32>
    tpu.vector_store %arg5[%c0_70, %c3_71, %c0_72, %c0_73], %98 {strides = array<i32>} : memref<1x20x8x128xf32, #tpu.memory_space<vmem>>, vector<1x1x8x128xf32>,
    %c0_74 = arith.constant 0 : index
    %c13 = arith.constant 13 : index
    %c0_75 = arith.constant 0 : index
    %c0_76 = arith.constant 0 : index
    %99 = vector.load %arg5[%c0_74, %c13, %c0_75, %c0_76] : memref<1x20x8x128xf32, #tpu.memory_space<vmem>>, vector<1x1x8x128xf32>
    %100 = vector.shape_cast %99 : vector<1x1x8x128xf32> to vector<8x128xf32>
    %cst_77 = arith.constant 0.000000e+00 : f32
    %101 = vector.broadcast %cst_77 : f32 to vector<1x8x128xf32>
    %102 = arith.select %89, %27, %101 : vector<1x8x128xi1>, vector<1x8x128xf32>
    %cst_78 = arith.constant dense<0.000000e+00> : vector<8x128xf32>
    %103 = vector.multi_reduction <add>, %102, %cst_78 [0] : vector<1x8x128xf32> to vector<8x128xf32>
    %104 = arith.addf %100, %103 : vector<8x128xf32>
    %c0_79 = arith.constant 0 : index
    %c13_80 = arith.constant 13 : index
    %c0_81 = arith.constant 0 : index
    %c0_82 = arith.constant 0 : index
    %105 = vector.load %arg5[%c0_79, %c13_80, %c0_81, %c0_82] : memref<1x20x8x128xf32, #tpu.memory_space<vmem>>, vector<1x1x8x128xf32>
    %106 = vector.shape_cast %105 : vector<1x1x8x128xf32> to vector<8x128xf32>
    %107 = vector.shape_cast %104 : vector<8x128xf32> to vector<1x1x8x128xf32>
    tpu.vector_store %arg5[%c0_79, %c13_80, %c0_81, %c0_82], %107 {strides = array<i32>} : memref<1x20x8x128xf32, #tpu.memory_space<vmem>>, vector<1x1x8x128xf32>,
    %cst_83 = arith.constant 5.000000e-01 : f32
    %108 = vector.broadcast %cst_83 : f32 to vector<1x8x128xf32>
    %109 = arith.cmpf olt, %26, %108 : vector<1x8x128xf32>
    %c0_84 = arith.constant 0 : index
    %c4 = arith.constant 4 : index
    %c0_85 = arith.constant 0 : index
    %c0_86 = arith.constant 0 : index
    %110 = vector.load %arg5[%c0_84, %c4, %c0_85, %c0_86] : memref<1x20x8x128xf32, #tpu.memory_space<vmem>>, vector<1x1x8x128xf32>
    %111 = vector.shape_cast %110 : vector<1x1x8x128xf32> to vector<8x128xf32>
    %112 = arith.extui %109 : vector<1x8x128xi1> to vector<1x8x128xi32>
    %113 = arith.sitofp %112 : vector<1x8x128xi32> to vector<1x8x128xf32>
    %cst_87 = arith.constant dense<0.000000e+00> : vector<8x128xf32>
    %114 = vector.multi_reduction <add>, %113, %cst_87 [0] : vector<1x8x128xf32> to vector<8x128xf32>
    %115 = arith.addf %111, %114 : vector<8x128xf32>
    %c0_88 = arith.constant 0 : index
    %c4_89 = arith.constant 4 : index
    %c0_90 = arith.constant 0 : index
    %c0_91 = arith.constant 0 : index
    %116 = vector.load %arg5[%c0_88, %c4_89, %c0_90, %c0_91] : memref<1x20x8x128xf32, #tpu.memory_space<vmem>>, vector<1x1x8x128xf32>
    %117 = vector.shape_cast %116 : vector<1x1x8x128xf32> to vector<8x128xf32>
    %118 = vector.shape_cast %115 : vector<8x128xf32> to vector<1x1x8x128xf32>
    tpu.vector_store %arg5[%c0_88, %c4_89, %c0_90, %c0_91], %118 {strides = array<i32>} : memref<1x20x8x128xf32, #tpu.memory_space<vmem>>, vector<1x1x8x128xf32>,
    %c0_92 = arith.constant 0 : index
    %c14 = arith.constant 14 : index
    %c0_93 = arith.constant 0 : index
    %c0_94 = arith.constant 0 : index
    %119 = vector.load %arg5[%c0_92, %c14, %c0_93, %c0_94] : memref<1x20x8x128xf32, #tpu.memory_space<vmem>>, vector<1x1x8x128xf32>
    %120 = vector.shape_cast %119 : vector<1x1x8x128xf32> to vector<8x128xf32>
    %cst_95 = arith.constant 0.000000e+00 : f32
    %121 = vector.broadcast %cst_95 : f32 to vector<1x8x128xf32>
    %122 = arith.select %109, %27, %121 : vector<1x8x128xi1>, vector<1x8x128xf32>
    %cst_96 = arith.constant dense<0.000000e+00> : vector<8x128xf32>
    %123 = vector.multi_reduction <add>, %122, %cst_96 [0] : vector<1x8x128xf32> to vector<8x128xf32>
    %124 = arith.addf %120, %123 : vector<8x128xf32>
    %c0_97 = arith.constant 0 : index
    %c14_98 = arith.constant 14 : index
    %c0_99 = arith.constant 0 : index
    %c0_100 = arith.constant 0 : index
    %125 = vector.load %arg5[%c0_97, %c14_98, %c0_99, %c0_100] : memref<1x20x8x128xf32, #tpu.memory_space<vmem>>, vector<1x1x8x128xf32>
    %126 = vector.shape_cast %125 : vector<1x1x8x128xf32> to vector<8x128xf32>
    %127 = vector.shape_cast %124 : vector<8x128xf32> to vector<1x1x8x128xf32>
    tpu.vector_store %arg5[%c0_97, %c14_98, %c0_99, %c0_100], %127 {strides = array<i32>} : memref<1x20x8x128xf32, #tpu.memory_space<vmem>>, vector<1x1x8x128xf32>,
    %cst_101 = arith.constant 6.000000e-01 : f32
    %128 = vector.broadcast %cst_101 : f32 to vector<1x8x128xf32>
    %129 = arith.cmpf olt, %26, %128 : vector<1x8x128xf32>
    %c0_102 = arith.constant 0 : index
    %c5 = arith.constant 5 : index
    %c0_103 = arith.constant 0 : index
    %c0_104 = arith.constant 0 : index
    %130 = vector.load %arg5[%c0_102, %c5, %c0_103, %c0_104] : memref<1x20x8x128xf32, #tpu.memory_space<vmem>>, vector<1x1x8x128xf32>
    %131 = vector.shape_cast %130 : vector<1x1x8x128xf32> to vector<8x128xf32>
    %132 = arith.extui %129 : vector<1x8x128xi1> to vector<1x8x128xi32>
    %133 = arith.sitofp %132 : vector<1x8x128xi32> to vector<1x8x128xf32>
    %cst_105 = arith.constant dense<0.000000e+00> : vector<8x128xf32>
    %134 = vector.multi_reduction <add>, %133, %cst_105 [0] : vector<1x8x128xf32> to vector<8x128xf32>
    %135 = arith.addf %131, %134 : vector<8x128xf32>
    %c0_106 = arith.constant 0 : index
    %c5_107 = arith.constant 5 : index
    %c0_108 = arith.constant 0 : index
    %c0_109 = arith.constant 0 : index
    %136 = vector.load %arg5[%c0_106, %c5_107, %c0_108, %c0_109] : memref<1x20x8x128xf32, #tpu.memory_space<vmem>>, vector<1x1x8x128xf32>
    %137 = vector.shape_cast %136 : vector<1x1x8x128xf32> to vector<8x128xf32>
    %138 = vector.shape_cast %135 : vector<8x128xf32> to vector<1x1x8x128xf32>
    tpu.vector_store %arg5[%c0_106, %c5_107, %c0_108, %c0_109], %138 {strides = array<i32>} : memref<1x20x8x128xf32, #tpu.memory_space<vmem>>, vector<1x1x8x128xf32>,
    %c0_110 = arith.constant 0 : index
    %c15 = arith.constant 15 : index
    %c0_111 = arith.constant 0 : index
    %c0_112 = arith.constant 0 : index
    %139 = vector.load %arg5[%c0_110, %c15, %c0_111, %c0_112] : memref<1x20x8x128xf32, #tpu.memory_space<vmem>>, vector<1x1x8x128xf32>
    %140 = vector.shape_cast %139 : vector<1x1x8x128xf32> to vector<8x128xf32>
    %cst_113 = arith.constant 0.000000e+00 : f32
    %141 = vector.broadcast %cst_113 : f32 to vector<1x8x128xf32>
    %142 = arith.select %129, %27, %141 : vector<1x8x128xi1>, vector<1x8x128xf32>
    %cst_114 = arith.constant dense<0.000000e+00> : vector<8x128xf32>
    %143 = vector.multi_reduction <add>, %142, %cst_114 [0] : vector<1x8x128xf32> to vector<8x128xf32>
    %144 = arith.addf %140, %143 : vector<8x128xf32>
    %c0_115 = arith.constant 0 : index
    %c15_116 = arith.constant 15 : index
    %c0_117 = arith.constant 0 : index
    %c0_118 = arith.constant 0 : index
    %145 = vector.load %arg5[%c0_115, %c15_116, %c0_117, %c0_118] : memref<1x20x8x128xf32, #tpu.memory_space<vmem>>, vector<1x1x8x128xf32>
    %146 = vector.shape_cast %145 : vector<1x1x8x128xf32> to vector<8x128xf32>
    %147 = vector.shape_cast %144 : vector<8x128xf32> to vector<1x1x8x128xf32>
    tpu.vector_store %arg5[%c0_115, %c15_116, %c0_117, %c0_118], %147 {strides = array<i32>} : memref<1x20x8x128xf32, #tpu.memory_space<vmem>>, vector<1x1x8x128xf32>,
    %cst_119 = arith.constant 0.699999988 : f32
    %148 = vector.broadcast %cst_119 : f32 to vector<1x8x128xf32>
    %149 = arith.cmpf olt, %26, %148 : vector<1x8x128xf32>
    %c0_120 = arith.constant 0 : index
    %c6 = arith.constant 6 : index
    %c0_121 = arith.constant 0 : index
    %c0_122 = arith.constant 0 : index
    %150 = vector.load %arg5[%c0_120, %c6, %c0_121, %c0_122] : memref<1x20x8x128xf32, #tpu.memory_space<vmem>>, vector<1x1x8x128xf32>
    %151 = vector.shape_cast %150 : vector<1x1x8x128xf32> to vector<8x128xf32>
    %152 = arith.extui %149 : vector<1x8x128xi1> to vector<1x8x128xi32>
    %153 = arith.sitofp %152 : vector<1x8x128xi32> to vector<1x8x128xf32>
    %cst_123 = arith.constant dense<0.000000e+00> : vector<8x128xf32>
    %154 = vector.multi_reduction <add>, %153, %cst_123 [0] : vector<1x8x128xf32> to vector<8x128xf32>
    %155 = arith.addf %151, %154 : vector<8x128xf32>
    %c0_124 = arith.constant 0 : index
    %c6_125 = arith.constant 6 : index
    %c0_126 = arith.constant 0 : index
    %c0_127 = arith.constant 0 : index
    %156 = vector.load %arg5[%c0_124, %c6_125, %c0_126, %c0_127] : memref<1x20x8x128xf32, #tpu.memory_space<vmem>>, vector<1x1x8x128xf32>
    %157 = vector.shape_cast %156 : vector<1x1x8x128xf32> to vector<8x128xf32>
    %158 = vector.shape_cast %155 : vector<8x128xf32> to vector<1x1x8x128xf32>
    tpu.vector_store %arg5[%c0_124, %c6_125, %c0_126, %c0_127], %158 {strides = array<i32>} : memref<1x20x8x128xf32, #tpu.memory_space<vmem>>, vector<1x1x8x128xf32>,
    %c0_128 = arith.constant 0 : index
    %c16 = arith.constant 16 : index
    %c0_129 = arith.constant 0 : index
    %c0_130 = arith.constant 0 : index
    %159 = vector.load %arg5[%c0_128, %c16, %c0_129, %c0_130] : memref<1x20x8x128xf32, #tpu.memory_space<vmem>>, vector<1x1x8x128xf32>
    %160 = vector.shape_cast %159 : vector<1x1x8x128xf32> to vector<8x128xf32>
    %cst_131 = arith.constant 0.000000e+00 : f32
    %161 = vector.broadcast %cst_131 : f32 to vector<1x8x128xf32>
    %162 = arith.select %149, %27, %161 : vector<1x8x128xi1>, vector<1x8x128xf32>
    %cst_132 = arith.constant dense<0.000000e+00> : vector<8x128xf32>
    %163 = vector.multi_reduction <add>, %162, %cst_132 [0] : vector<1x8x128xf32> to vector<8x128xf32>
    %164 = arith.addf %160, %163 : vector<8x128xf32>
    %c0_133 = arith.constant 0 : index
    %c16_134 = arith.constant 16 : index
    %c0_135 = arith.constant 0 : index
    %c0_136 = arith.constant 0 : index
    %165 = vector.load %arg5[%c0_133, %c16_134, %c0_135, %c0_136] : memref<1x20x8x128xf32, #tpu.memory_space<vmem>>, vector<1x1x8x128xf32>
    %166 = vector.shape_cast %165 : vector<1x1x8x128xf32> to vector<8x128xf32>
    %167 = vector.shape_cast %164 : vector<8x128xf32> to vector<1x1x8x128xf32>
    tpu.vector_store %arg5[%c0_133, %c16_134, %c0_135, %c0_136], %167 {strides = array<i32>} : memref<1x20x8x128xf32, #tpu.memory_space<vmem>>, vector<1x1x8x128xf32>,
    %cst_137 = arith.constant 8.000000e-01 : f32
    %168 = vector.broadcast %cst_137 : f32 to vector<1x8x128xf32>
    %169 = arith.cmpf olt, %26, %168 : vector<1x8x128xf32>
    %c0_138 = arith.constant 0 : index
    %c7 = arith.constant 7 : index
    %c0_139 = arith.constant 0 : index
    %c0_140 = arith.constant 0 : index
    %170 = vector.load %arg5[%c0_138, %c7, %c0_139, %c0_140] : memref<1x20x8x128xf32, #tpu.memory_space<vmem>>, vector<1x1x8x128xf32>
    %171 = vector.shape_cast %170 : vector<1x1x8x128xf32> to vector<8x128xf32>
    %172 = arith.extui %169 : vector<1x8x128xi1> to vector<1x8x128xi32>
    %173 = arith.sitofp %172 : vector<1x8x128xi32> to vector<1x8x128xf32>
    %cst_141 = arith.constant dense<0.000000e+00> : vector<8x128xf32>
    %174 = vector.multi_reduction <add>, %173, %cst_141 [0] : vector<1x8x128xf32> to vector<8x128xf32>
    %175 = arith.addf %171, %174 : vector<8x128xf32>
    %c0_142 = arith.constant 0 : index
    %c7_143 = arith.constant 7 : index
    %c0_144 = arith.constant 0 : index
    %c0_145 = arith.constant 0 : index
    %176 = vector.load %arg5[%c0_142, %c7_143, %c0_144, %c0_145] : memref<1x20x8x128xf32, #tpu.memory_space<vmem>>, vector<1x1x8x128xf32>
    %177 = vector.shape_cast %176 : vector<1x1x8x128xf32> to vector<8x128xf32>
    %178 = vector.shape_cast %175 : vector<8x128xf32> to vector<1x1x8x128xf32>
    tpu.vector_store %arg5[%c0_142, %c7_143, %c0_144, %c0_145], %178 {strides = array<i32>} : memref<1x20x8x128xf32, #tpu.memory_space<vmem>>, vector<1x1x8x128xf32>,
    %c0_146 = arith.constant 0 : index
    %c17 = arith.constant 17 : index
    %c0_147 = arith.constant 0 : index
    %c0_148 = arith.constant 0 : index
    %179 = vector.load %arg5[%c0_146, %c17, %c0_147, %c0_148] : memref<1x20x8x128xf32, #tpu.memory_space<vmem>>, vector<1x1x8x128xf32>
    %180 = vector.shape_cast %179 : vector<1x1x8x128xf32> to vector<8x128xf32>
    %cst_149 = arith.constant 0.000000e+00 : f32
    %181 = vector.broadcast %cst_149 : f32 to vector<1x8x128xf32>
    %182 = arith.select %169, %27, %181 : vector<1x8x128xi1>, vector<1x8x128xf32>
    %cst_150 = arith.constant dense<0.000000e+00> : vector<8x128xf32>
    %183 = vector.multi_reduction <add>, %182, %cst_150 [0] : vector<1x8x128xf32> to vector<8x128xf32>
    %184 = arith.addf %180, %183 : vector<8x128xf32>
    %c0_151 = arith.constant 0 : index
    %c17_152 = arith.constant 17 : index
    %c0_153 = arith.constant 0 : index
    %c0_154 = arith.constant 0 : index
    %185 = vector.load %arg5[%c0_151, %c17_152, %c0_153, %c0_154] : memref<1x20x8x128xf32, #tpu.memory_space<vmem>>, vector<1x1x8x128xf32>
    %186 = vector.shape_cast %185 : vector<1x1x8x128xf32> to vector<8x128xf32>
    %187 = vector.shape_cast %184 : vector<8x128xf32> to vector<1x1x8x128xf32>
    tpu.vector_store %arg5[%c0_151, %c17_152, %c0_153, %c0_154], %187 {strides = array<i32>} : memref<1x20x8x128xf32, #tpu.memory_space<vmem>>, vector<1x1x8x128xf32>,
    %cst_155 = arith.constant 0.899999976 : f32
    %188 = vector.broadcast %cst_155 : f32 to vector<1x8x128xf32>
    %189 = arith.cmpf olt, %26, %188 : vector<1x8x128xf32>
    %c0_156 = arith.constant 0 : index
    %c8 = arith.constant 8 : index
    %c0_157 = arith.constant 0 : index
    %c0_158 = arith.constant 0 : index
    %190 = vector.load %arg5[%c0_156, %c8, %c0_157, %c0_158] : memref<1x20x8x128xf32, #tpu.memory_space<vmem>>, vector<1x1x8x128xf32>
    %191 = vector.shape_cast %190 : vector<1x1x8x128xf32> to vector<8x128xf32>
    %192 = arith.extui %189 : vector<1x8x128xi1> to vector<1x8x128xi32>
    %193 = arith.sitofp %192 : vector<1x8x128xi32> to vector<1x8x128xf32>
    %cst_159 = arith.constant dense<0.000000e+00> : vector<8x128xf32>
    %194 = vector.multi_reduction <add>, %193, %cst_159 [0] : vector<1x8x128xf32> to vector<8x128xf32>
    %195 = arith.addf %191, %194 : vector<8x128xf32>
    %c0_160 = arith.constant 0 : index
    %c8_161 = arith.constant 8 : index
    %c0_162 = arith.constant 0 : index
    %c0_163 = arith.constant 0 : index
    %196 = vector.load %arg5[%c0_160, %c8_161, %c0_162, %c0_163] : memref<1x20x8x128xf32, #tpu.memory_space<vmem>>, vector<1x1x8x128xf32>
    %197 = vector.shape_cast %196 : vector<1x1x8x128xf32> to vector<8x128xf32>
    %198 = vector.shape_cast %195 : vector<8x128xf32> to vector<1x1x8x128xf32>
    tpu.vector_store %arg5[%c0_160, %c8_161, %c0_162, %c0_163], %198 {strides = array<i32>} : memref<1x20x8x128xf32, #tpu.memory_space<vmem>>, vector<1x1x8x128xf32>,
    %c0_164 = arith.constant 0 : index
    %c18 = arith.constant 18 : index
    %c0_165 = arith.constant 0 : index
    %c0_166 = arith.constant 0 : index
    %199 = vector.load %arg5[%c0_164, %c18, %c0_165, %c0_166] : memref<1x20x8x128xf32, #tpu.memory_space<vmem>>, vector<1x1x8x128xf32>
    %200 = vector.shape_cast %199 : vector<1x1x8x128xf32> to vector<8x128xf32>
    %cst_167 = arith.constant 0.000000e+00 : f32
    %201 = vector.broadcast %cst_167 : f32 to vector<1x8x128xf32>
    %202 = arith.select %189, %27, %201 : vector<1x8x128xi1>, vector<1x8x128xf32>
    %cst_168 = arith.constant dense<0.000000e+00> : vector<8x128xf32>
    %203 = vector.multi_reduction <add>, %202, %cst_168 [0] : vector<1x8x128xf32> to vector<8x128xf32>
    %204 = arith.addf %200, %203 : vector<8x128xf32>
    %c0_169 = arith.constant 0 : index
    %c18_170 = arith.constant 18 : index
    %c0_171 = arith.constant 0 : index
    %c0_172 = arith.constant 0 : index
    %205 = vector.load %arg5[%c0_169, %c18_170, %c0_171, %c0_172] : memref<1x20x8x128xf32, #tpu.memory_space<vmem>>, vector<1x1x8x128xf32>
    %206 = vector.shape_cast %205 : vector<1x1x8x128xf32> to vector<8x128xf32>
    %207 = vector.shape_cast %204 : vector<8x128xf32> to vector<1x1x8x128xf32>
    tpu.vector_store %arg5[%c0_169, %c18_170, %c0_171, %c0_172], %207 {strides = array<i32>} : memref<1x20x8x128xf32, #tpu.memory_space<vmem>>, vector<1x1x8x128xf32>,
    %cst_173 = arith.constant 1.00000095 : f32
    %208 = vector.broadcast %cst_173 : f32 to vector<1x8x128xf32>
    %209 = arith.cmpf olt, %26, %208 : vector<1x8x128xf32>
    %c0_174 = arith.constant 0 : index
    %c9 = arith.constant 9 : index
    %c0_175 = arith.constant 0 : index
    %c0_176 = arith.constant 0 : index
    %210 = vector.load %arg5[%c0_174, %c9, %c0_175, %c0_176] : memref<1x20x8x128xf32, #tpu.memory_space<vmem>>, vector<1x1x8x128xf32>
    %211 = vector.shape_cast %210 : vector<1x1x8x128xf32> to vector<8x128xf32>
    %212 = arith.extui %209 : vector<1x8x128xi1> to vector<1x8x128xi32>
    %213 = arith.sitofp %212 : vector<1x8x128xi32> to vector<1x8x128xf32>
    %cst_177 = arith.constant dense<0.000000e+00> : vector<8x128xf32>
    %214 = vector.multi_reduction <add>, %213, %cst_177 [0] : vector<1x8x128xf32> to vector<8x128xf32>
    %215 = arith.addf %211, %214 : vector<8x128xf32>
    %c0_178 = arith.constant 0 : index
    %c9_179 = arith.constant 9 : index
    %c0_180 = arith.constant 0 : index
    %c0_181 = arith.constant 0 : index
    %216 = vector.load %arg5[%c0_178, %c9_179, %c0_180, %c0_181] : memref<1x20x8x128xf32, #tpu.memory_space<vmem>>, vector<1x1x8x128xf32>
    %217 = vector.shape_cast %216 : vector<1x1x8x128xf32> to vector<8x128xf32>
    %218 = vector.shape_cast %215 : vector<8x128xf32> to vector<1x1x8x128xf32>
    tpu.vector_store %arg5[%c0_178, %c9_179, %c0_180, %c0_181], %218 {strides = array<i32>} : memref<1x20x8x128xf32, #tpu.memory_space<vmem>>, vector<1x1x8x128xf32>,
    %c0_182 = arith.constant 0 : index
    %c19 = arith.constant 19 : index
    %c0_183 = arith.constant 0 : index
    %c0_184 = arith.constant 0 : index
    %219 = vector.load %arg5[%c0_182, %c19, %c0_183, %c0_184] : memref<1x20x8x128xf32, #tpu.memory_space<vmem>>, vector<1x1x8x128xf32>
    %220 = vector.shape_cast %219 : vector<1x1x8x128xf32> to vector<8x128xf32>
    %cst_185 = arith.constant 0.000000e+00 : f32
    %221 = vector.broadcast %cst_185 : f32 to vector<1x8x128xf32>
    %222 = arith.select %209, %27, %221 : vector<1x8x128xi1>, vector<1x8x128xf32>
    %cst_186 = arith.constant dense<0.000000e+00> : vector<8x128xf32>
    %223 = vector.multi_reduction <add>, %222, %cst_186 [0] : vector<1x8x128xf32> to vector<8x128xf32>
    %224 = arith.addf %220, %223 : vector<8x128xf32>
    %c0_187 = arith.constant 0 : index
    %c19_188 = arith.constant 19 : index
    %c0_189 = arith.constant 0 : index
    %c0_190 = arith.constant 0 : index
    %225 = vector.load %arg5[%c0_187, %c19_188, %c0_189, %c0_190] : memref<1x20x8x128xf32, #tpu.memory_space<vmem>>, vector<1x1x8x128xf32>
    %226 = vector.shape_cast %225 : vector<1x1x8x128xf32> to vector<8x128xf32>
    %227 = vector.shape_cast %224 : vector<8x128xf32> to vector<1x1x8x128xf32>
    tpu.vector_store %arg5[%c0_187, %c19_188, %c0_189, %c0_190], %227 {strides = array<i32>} : memref<1x20x8x128xf32, #tpu.memory_space<vmem>>, vector<1x1x8x128xf32>,
    return
  }
  func.func @transform_0(%arg0: i32, %arg1: i32) -> (i32, i32) {
    %c1_i32 = arith.constant 1 : i32
    %0 = arith.muli %arg0, %c1_i32 : i32
    %1 = arith.addi %0, %arg1 : i32
    %c0_i32 = arith.constant 0 : i32
    %2 = arith.minsi %1, %c0_i32 : i32
    %c0_i32_0 = arith.constant 0 : i32
    %c0_i32_1 = arith.constant 0 : i32
    return %2, %c0_i32_0 : i32, i32
  }
  func.func @transform_1(%arg0: i32, %arg1: i32) -> (i32, i32) {
    %c1_i32 = arith.constant 1 : i32
    %0 = arith.muli %arg0, %c1_i32 : i32
    %1 = arith.addi %0, %arg1 : i32
    %c0_i32 = arith.constant 0 : i32
    %2 = arith.minsi %1, %c0_i32 : i32
    %c0_i32_0 = arith.constant 0 : i32
    %c0_i32_1 = arith.constant 0 : i32
    return %2, %c0_i32_0 : i32, i32
  }
  func.func @transform_2(%arg0: i32, %arg1: i32) -> (i32, i32) {
    %c1_i32 = arith.constant 1 : i32
    %0 = arith.muli %arg0, %c1_i32 : i32
    %1 = arith.addi %0, %arg1 : i32
    %c0_i32 = arith.constant 0 : i32
    %2 = arith.minsi %1, %c0_i32 : i32
    %c0_i32_0 = arith.constant 0 : i32
    %c0_i32_1 = arith.constant 0 : i32
    return %2, %c0_i32_0 : i32, i32
  }
  func.func @transform_3(%arg0: i32, %arg1: i32) -> (i32, i32, i32, i32) {
    %c0_i32 = arith.constant 0 : i32
    %c0_i32_0 = arith.constant 0 : i32
    %c0_i32_1 = arith.constant 0 : i32
    %c0_i32_2 = arith.constant 0 : i32
    return %arg0, %c0_i32, %c0_i32_0, %c0_i32_1 : i32, i32, i32, i32
  }
}

</mosaic_0001>

<llo_original>
// kernel: tpu_custom_call.1
$region0: #{tpu_custom_call.1}
  #allocation0 [shape = 'u32[]', space=smem, size = 0x4, offset = 0x4, fixed_abs, tag = 'smem constant byte address 0x4 - core index']
  #allocation1 [shape = 'u32[144,128]{1,0:T(1,128)}', space=vmem, size = 0x12000, scoped, tag = 'internal scratch']
  %s0 = inlined_call_operand.hbm [shape: f32[8,128], index: 0, kind: input, shape index: {}]
  %s1 = inlined_call_operand.hbm [shape: f32[8,128], index: 1, kind: input, shape index: {}]
  %s2 = inlined_call_operand.hbm [shape: f32[8,128], index: 2, kind: input, shape index: {}]
  %s3 = inlined_call_operand.hbm [shape: f32[1,20,8,128], index: 3, kind: output, shape index: {}]
  %s4 = sld [smem:[#allocation0]]
  $region38: #{tpu_custom_call.1} parent=0
    _
  %s6 = ssub.s32 1, %s4
  %s7 = scalar_select 0, %s6, %s4
  $region1: #{tpu_custom_call.1} parent=0
    #allocation2 [shape = 'u8[4096]{0}', space=vmem, size = 0x1000, scoped, tag = 'input window, operand 0, single buffered']
    #allocation3 [shape = 's32[1]{0}', space=sflag, size = 0x4, scoped, tag = 'scoped memory for tpu_custom_call.1']
    #allocation4 [shape = 's32[1]{0}', space=sflag, size = 0x4, scoped, tag = 'scoped memory for tpu_custom_call.1']
    #allocation5 [shape = 'u8[4096]{0}', space=vmem, size = 0x1000, scoped, tag = 'input window, operand 1, single buffered']
    #allocation6 [shape = 's32[1]{0}', space=sflag, size = 0x4, scoped, tag = 'scoped memory for tpu_custom_call.1']
    #allocation7 [shape = 'u8[4096]{0}', space=vmem, size = 0x1000, scoped, tag = 'input window, operand 2, single buffered']
    #allocation8 [shape = 'u8[81920]{0}', space=vmem, size = 0x14000, scoped, tag = 'output window, operand 0, single buffered']
    %8 = vsyncpa [#allocation3], 0
    %9 = vsyncpa [#allocation6], 0
    %10 = vsyncpa [#allocation4], 0
    // Predicated region
    $region2: #{tpu_custom_call.1} parent=1 // pred_check
      _
    $region3: #{tpu_custom_call.1} parent=1 // pred_check_branch
      %12 = sbr.rel (0) target = $region5
    $region4: #{tpu_custom_call.1} parent=1 // pred_region
      %s13 = sadd.s32 0, 0
      %p14 = scmp.lt.s32.totalorder %s13, 0
      %s15 = scalar_select %p14, %s13, 0
      %s17 = ssub.s32 128, 128
      %18 = vsyncadd [#allocation3], %s17
      %s19 = smul.addr %s15, 128
      %s20 = scalar_lea.hbm %s0, %s19
      %s22 = sshll.u32 [#allocation2], 4
      %s23 = int_to_ptr.vmem [resolvable:$true] %s22
      %25 = dma.hbm_to_vmem [thread:$0]  %s20, 128, %s23, [#allocation3]
    $region5: #{tpu_custom_call.1} parent=1 // pred_fallthru
      _
    // Predicated region
    $region6: #{tpu_custom_call.1} parent=1 // pred_check
      _
    $region7: #{tpu_custom_call.1} parent=1 // pred_check_branch
      %27 = sbr.rel (0) target = $region9
    $region8: #{tpu_custom_call.1} parent=1 // pred_region
      %s28 = sadd.s32 0, 0
      %p29 = scmp.lt.s32.totalorder %s28, 0
      %s30 = scalar_select %p29, %s28, 0
      %s32 = ssub.s32 128, 128
      %33 = vsyncadd [#allocation6], %s32
      %s34 = smul.addr %s30, 128
      %s35 = scalar_lea.hbm %s1, %s34
      %s37 = sshll.u32 [#allocation5], 4
      %s38 = int_to_ptr.vmem [resolvable:$true] %s37
      %40 = dma.hbm_to_vmem [thread:$0]  %s35, 128, %s38, [#allocation6]
    $region9: #{tpu_custom_call.1} parent=1 // pred_fallthru
      _
    // Predicated region
    $region10: #{tpu_custom_call.1} parent=1 // pred_check
      _
    $region11: #{tpu_custom_call.1} parent=1 // pred_check_branch
      %42 = sbr.rel (0) target = $region13
    $region12: #{tpu_custom_call.1} parent=1 // pred_region
      %s43 = sadd.s32 0, 0
      %p44 = scmp.lt.s32.totalorder %s43, 0
      %s45 = scalar_select %p44, %s43, 0
      %s47 = ssub.s32 128, 128
      %48 = vsyncadd [#allocation6], %s47
      %s49 = smul.addr %s45, 128
      %s50 = scalar_lea.hbm %s2, %s49
      %s52 = sshll.u32 [#allocation7], 4
      %s53 = int_to_ptr.vmem [resolvable:$true] %s52
      %55 = dma.hbm_to_vmem [thread:$0]  %s50, 128, %s53, [#allocation6]
    $region13: #{tpu_custom_call.1} parent=1 // pred_fallthru
      _
    // Predicated region
    $region14: #{tpu_custom_call.1} parent=1 // pred_check
      _
    $region15: #{tpu_custom_call.1} parent=1 // pred_check_branch
      %57 = sbr.rel (0) target = $region17
    $region16: #{tpu_custom_call.1} parent=1 // pred_region
      %58 = dma.done [#allocation3], 128
    $region17: #{tpu_custom_call.1} parent=1 // pred_fallthru
      _
    // Predicated region
    $region18: #{tpu_custom_call.1} parent=1 // pred_check
      _
    $region19: #{tpu_custom_call.1} parent=1 // pred_check_branch
      %60 = sbr.rel (0) target = $region21
    $region20: #{tpu_custom_call.1} parent=1 // pred_region
      %61 = dma.done [#allocation6], 128
    $region21: #{tpu_custom_call.1} parent=1 // pred_fallthru
      _
    // Predicated region
    $region22: #{tpu_custom_call.1} parent=1 // pred_check
      _
    $region23: #{tpu_custom_call.1} parent=1 // pred_check_branch
      %63 = sbr.rel (0) target = $region25
    $region24: #{tpu_custom_call.1} parent=1 // pred_region
      %64 = dma.done [#allocation6], 128
    $region25: #{tpu_custom_call.1} parent=1 // pred_fallthru
      _
    %s65 = sadd.s32 0, 0
    %p66 = scmp.lt.s32.totalorder %s65, 0
    %s67 = scalar_select %p66, %s65, 0
    %s68 = sadd.s32 0, 0
    %p69 = scmp.lt.s32.totalorder %s68, 0
    %s70 = scalar_select %p69, %s68, 0
    %s71 = sadd.s32 0, 0
    %p72 = scmp.lt.s32.totalorder %s71, 0
    %s73 = scalar_select %p72, %s71, 0
    %p74 = scmp.eq.s32.totalorder 0, 0
    // Predicated region
    $region26: #{tpu_custom_call.1} parent=1 // pred_check
      %p75 = pneg %p74
    $region27: #{tpu_custom_call.1} parent=1 // pred_check_branch
      %77 = sbr.rel (%p75) target = $region29
    $region28: #{tpu_custom_call.1} parent=1 // pred_region
      %78 = vst [vmem:[#allocation8] sm:$0xff] 0.0
      %79 = vst [vmem:[#allocation8 + $0x8] sm:$0xff] 0.0
      %80 = vst [vmem:[#allocation8 + $0x10] sm:$0xff] 0.0
      %81 = vst [vmem:[#allocation8 + $0x18] sm:$0xff] 0.0
      %82 = vst [vmem:[#allocation8 + $0x20] sm:$0xff] 0.0
      %83 = vst [vmem:[#allocation8 + $0x28] sm:$0xff] 0.0
      %84 = vst [vmem:[#allocation8 + $0x30] sm:$0xff] 0.0
      %85 = vst [vmem:[#allocation8 + $0x38] sm:$0xff] 0.0
      %86 = vst [vmem:[#allocation8 + $0x40] sm:$0xff] 0.0
      %87 = vst [vmem:[#allocation8 + $0x48] sm:$0xff] 0.0
      %88 = vst [vmem:[#allocation8 + $0x50] sm:$0xff] 0.0
      %89 = vst [vmem:[#allocation8 + $0x58] sm:$0xff] 0.0
      %90 = vst [vmem:[#allocation8 + $0x60] sm:$0xff] 0.0
      %91 = vst [vmem:[#allocation8 + $0x68] sm:$0xff] 0.0
      %92 = vst [vmem:[#allocation8 + $0x70] sm:$0xff] 0.0
      %93 = vst [vmem:[#allocation8 + $0x78] sm:$0xff] 0.0
      %94 = vst [vmem:[#allocation8 + $0x80] sm:$0xff] 0.0
      %95 = vst [vmem:[#allocation8 + $0x88] sm:$0xff] 0.0
      %96 = vst [vmem:[#allocation8 + $0x90] sm:$0xff] 0.0
      %97 = vst [vmem:[#allocation8 + $0x98] sm:$0xff] 0.0
    $region29: #{tpu_custom_call.1} parent=1 // pred_fallthru
      _
    %v98 = vld [vmem:[#allocation2] sm:$0xff]
    %v99 = vld [vmem:[#allocation5] sm:$0xff]
    %v100 = vld [vmem:[#allocation7] sm:$0xff]
    %v101 = vxor.u32 %v98, 2147483648
    %v102 = vmul.f32 %v101, 1.442695
    %v103 = vpow.pop %v102
    %v104 = vadd.f32 %v103, 1.0
    %v105 = vrcp.pop %v104
    %v106 = vmul.f32 1.0, %v105
    %v107 = vsub.f32 %v106, %v99
    %v108 = vand.u32 2147483647, %v107
    %vm109 = vcmp.gt.f32.partialorder %v100, 0.0
    %v110 = vsel %vm109, %v108, 2.0
    %v111 = vmax.f32 %v98, 0.0
    %v112 = vmul.f32 %v98, %v99
    %v113 = vsub.f32 %v111, %v112
    %v114 = vsub.f32 1.0, %v106
    %v115 = vmax.f32 %v106, %v114
    %v116 = vlog2.pop %v115
    %v117 = vmul.f32 %v116, 0.6931472
    %v118 = vsub.f32 %v113, %v117
    %vm119 = vcmp.lt.f32.partialorder %v110, 0.1
    %v120 = vld [vmem:[#allocation8] sm:$0xff]
    %v121 = vsel %vm119, 1, 0
    %v122 = vcvt.s32.f32 %v121
    %v123 = vadd.f32 %v122, 0.0
    %v124 = vadd.f32 %v120, %v123
    %125 = vst [vmem:[#allocation8] sm:$0xff] %v124
    %s126 = scalar_lea.vmem [#allocation8], 80
    %v127 = vld [vmem:[%s126] sm:$0xff]
    %v128 = vsel %vm119, %v118, 0.0
    %v129 = vadd.f32 %v128, 0.0
    %v130 = vadd.f32 %v127, %v129
    %131 = vst [vmem:[%s126] sm:$0xff] %v130
    %vm132 = vcmp.lt.f32.partialorder %v110, 0.2
    %s133 = scalar_lea.vmem [#allocation8], 8
    %v134 = vld [vmem:[%s133] sm:$0xff]
    %v135 = vsel %vm132, 1, 0
    %v136 = vcvt.s32.f32 %v135
    %v137 = vadd.f32 %v136, 0.0
    %v138 = vadd.f32 %v134, %v137
    %139 = vst [vmem:[%s133] sm:$0xff] %v138
    %s140 = scalar_lea.vmem [#allocation8], 88
    %v141 = vld [vmem:[%s140] sm:$0xff]
    %v142 = vsel %vm132, %v118, 0.0
    %v143 = vadd.f32 %v142, 0.0
    %v144 = vadd.f32 %v141, %v143
    %145 = vst [vmem:[%s140] sm:$0xff] %v144
    %vm146 = vcmp.lt.f32.partialorder %v110, 0.3
    %s147 = scalar_lea.vmem [#allocation8], 16
    %v148 = vld [vmem:[%s147] sm:$0xff]
    %v149 = vsel %vm146, 1, 0
    %v150 = vcvt.s32.f32 %v149
    %v151 = vadd.f32 %v150, 0.0
    %v152 = vadd.f32 %v148, %v151
    %153 = vst [vmem:[%s147] sm:$0xff] %v152
    %s154 = scalar_lea.vmem [#allocation8], 96
    %v155 = vld [vmem:[%s154] sm:$0xff]
    %v156 = vsel %vm146, %v118, 0.0
    %v157 = vadd.f32 %v156, 0.0
    %v158 = vadd.f32 %v155, %v157
    %159 = vst [vmem:[%s154] sm:$0xff] %v158
    %vm160 = vcmp.lt.f32.partialorder %v110, 0.4
    %s161 = scalar_lea.vmem [#allocation8], 24
    %v162 = vld [vmem:[%s161] sm:$0xff]
    %v163 = vsel %vm160, 1, 0
    %v164 = vcvt.s32.f32 %v163
    %v165 = vadd.f32 %v164, 0.0
    %v166 = vadd.f32 %v162, %v165
    %167 = vst [vmem:[%s161] sm:$0xff] %v166
    %s168 = scalar_lea.vmem [#allocation8], 104
    %v169 = vld [vmem:[%s168] sm:$0xff]
    %v170 = vsel %vm160, %v118, 0.0
    %v171 = vadd.f32 %v170, 0.0
    %v172 = vadd.f32 %v169, %v171
    %173 = vst [vmem:[%s168] sm:$0xff] %v172
    %vm174 = vcmp.lt.f32.partialorder %v110, 0.5
    %s175 = scalar_lea.vmem [#allocation8], 32
    %v176 = vld [vmem:[%s175] sm:$0xff]
    %v177 = vsel %vm174, 1, 0
    %v178 = vcvt.s32.f32 %v177
    %v179 = vadd.f32 %v178, 0.0
    %v180 = vadd.f32 %v176, %v179
    %181 = vst [vmem:[%s175] sm:$0xff] %v180
    %s182 = scalar_lea.vmem [#allocation8], 112
    %v183 = vld [vmem:[%s182] sm:$0xff]
    %v184 = vsel %vm174, %v118, 0.0
    %v185 = vadd.f32 %v184, 0.0
    %v186 = vadd.f32 %v183, %v185
    %187 = vst [vmem:[%s182] sm:$0xff] %v186
    %vm188 = vcmp.lt.f32.partialorder %v110, 0.6
    %s189 = scalar_lea.vmem [#allocation8], 40
    %v190 = vld [vmem:[%s189] sm:$0xff]
    %v191 = vsel %vm188, 1, 0
    %v192 = vcvt.s32.f32 %v191
    %v193 = vadd.f32 %v192, 0.0
    %v194 = vadd.f32 %v190, %v193
    %195 = vst [vmem:[%s189] sm:$0xff] %v194
    %s196 = scalar_lea.vmem [#allocation8], 120
    %v197 = vld [vmem:[%s196] sm:$0xff]
    %v198 = vsel %vm188, %v118, 0.0
    %v199 = vadd.f32 %v198, 0.0
    %v200 = vadd.f32 %v197, %v199
    %201 = vst [vmem:[%s196] sm:$0xff] %v200
    %vm202 = vcmp.lt.f32.partialorder %v110, 0.7
    %s203 = scalar_lea.vmem [#allocation8], 48
    %v204 = vld [vmem:[%s203] sm:$0xff]
    %v205 = vsel %vm202, 1, 0
    %v206 = vcvt.s32.f32 %v205
    %v207 = vadd.f32 %v206, 0.0
    %v208 = vadd.f32 %v204, %v207
    %209 = vst [vmem:[%s203] sm:$0xff] %v208
    %s210 = scalar_lea.vmem [#allocation8], 128
    %v211 = vld [vmem:[%s210] sm:$0xff]
    %v212 = vsel %vm202, %v118, 0.0
    %v213 = vadd.f32 %v212, 0.0
    %v214 = vadd.f32 %v211, %v213
    %215 = vst [vmem:[%s210] sm:$0xff] %v214
    %vm216 = vcmp.lt.f32.partialorder %v110, 0.8
    %s217 = scalar_lea.vmem [#allocation8], 56
    %v218 = vld [vmem:[%s217] sm:$0xff]
    %v219 = vsel %vm216, 1, 0
    %v220 = vcvt.s32.f32 %v219
    %v221 = vadd.f32 %v220, 0.0
    %v222 = vadd.f32 %v218, %v221
    %223 = vst [vmem:[%s217] sm:$0xff] %v222
    %s224 = scalar_lea.vmem [#allocation8], 136
    %v225 = vld [vmem:[%s224] sm:$0xff]
    %v226 = vsel %vm216, %v118, 0.0
    %v227 = vadd.f32 %v226, 0.0
    %v228 = vadd.f32 %v225, %v227
    %229 = vst [vmem:[%s224] sm:$0xff] %v228
    %vm230 = vcmp.lt.f32.partialorder %v110, 0.9
    %s231 = scalar_lea.vmem [#allocation8], 64
    %v232 = vld [vmem:[%s231] sm:$0xff]
    %v233 = vsel %vm230, 1, 0
    %v234 = vcvt.s32.f32 %v233
    %v235 = vadd.f32 %v234, 0.0
    %v236 = vadd.f32 %v232, %v235
    %237 = vst [vmem:[%s231] sm:$0xff] %v236
    %s238 = scalar_lea.vmem [#allocation8], 144
    %v239 = vld [vmem:[%s238] sm:$0xff]
    %v240 = vsel %vm230, %v118, 0.0
    %v241 = vadd.f32 %v240, 0.0
    %v242 = vadd.f32 %v239, %v241
    %243 = vst [vmem:[%s238] sm:$0xff] %v242
    %vm244 = vcmp.lt.f32.partialorder %v110, 1.000001
    %s245 = scalar_lea.vmem [#allocation8], 72
    %v246 = vld [vmem:[%s245] sm:$0xff]
    %v247 = vsel %vm244, 1, 0
    %v248 = vcvt.s32.f32 %v247
    %v249 = vadd.f32 %v248, 0.0
    %v250 = vadd.f32 %v246, %v249
    %251 = vst [vmem:[%s245] sm:$0xff] %v250
    %s252 = scalar_lea.vmem [#allocation8], 152
    %v253 = vld [vmem:[%s252] sm:$0xff]
    %v254 = vsel %vm244, %v118, 0.0
    %v255 = vadd.f32 %v254, 0.0
    %v256 = vadd.f32 %v253, %v255
    %257 = vst [vmem:[%s252] sm:$0xff] %v256
    // Predicated region
    $region30: #{tpu_custom_call.1} parent=1 // pred_check
      _
    $region31: #{tpu_custom_call.1} parent=1 // pred_check_branch
      %259 = sbr.rel (0) target = $region33
    $region32: #{tpu_custom_call.1} parent=1 // pred_region
      %s261 = ssub.s32 2560, 2560
      %262 = vsyncadd [#allocation4], %s261
      %s263 = sshll.u32 [#allocation8], 4
      %s264 = int_to_ptr.vmem [resolvable:$true] %s263
      %269 = dma.vmem_to_hbm [thread:$0]  %s264, 2560, %s3, [#allocation4], 128, 128, 8
    $region33: #{tpu_custom_call.1} parent=1 // pred_fallthru
      _
    // Predicated region
    $region34: #{tpu_custom_call.1} parent=1 // pred_check
      _
    $region35: #{tpu_custom_call.1} parent=1 // pred_check_branch
      %271 = sbr.rel (0) target = $region37
    $region36: #{tpu_custom_call.1} parent=1 // pred_region
      %272 = dma.done [#allocation4], 2560
    $region37: #{tpu_custom_call.1} parent=1 // pred_fallthru
      _
    %273 = vsyncpa [#allocation3], 1
    %274 = vsyncpa [#allocation6], 1
    %275 = vsyncpa [#allocation4], 1

</llo_original>
